<compile_context>
chip_gen: v6e
topology: v6e:2x2x1
jax: 0.10.0
libtpu: 0.0.40
codegen_flags: <defaults>
</compile_context>

<pallas_src>
import math
import functools

import jax
import jax.numpy as jnp
from jax.experimental import pallas as pl
from jax.experimental.pallas import tpu as pltpu


def _round_up(x, m):
    return ((x + m - 1) // m) * m


def _patch_embed_kernel(x_ref, w_ref, p_ref, o_ref, *, c_out):
    """Fused GEMM + bias + LayerNorm(C_out) on one (tile_n, C_pad) row tile.

    x_ref: (tile_n, K) bf16      w_ref: (K, C_pad) bf16
    p_ref: (8, C_pad) f32 (row 0 = bias, 1 = gamma, 2 = beta)
    o_ref: (tile_n, C_pad)
    """
    c_pad = o_ref.shape[-1]

    # bf16 MXU GEMM with f32 accumulation.
    y = jnp.dot(x_ref[...], w_ref[...], preferred_element_type=jnp.float32)
    params = p_ref[...]
    y = y + params[0:1, :]                      # pad lanes stay exactly 0

    # LayerNorm over the *real* channel lanes only (biased var, eps=1e-5,
    # matching torch.nn.LayerNorm).  Two-pass (numerically safe) form; only
    # `centered` needs masking since pad lanes of y are already exactly 0.
    inv_c = 1.0 / float(c_out)
    mean = jnp.sum(y, axis=-1, keepdims=True) * inv_c
    centered = y - mean
    if c_pad != c_out:
        lane = jax.lax.broadcasted_iota(jnp.int32, (1, c_pad), 1)
        centered = jnp.where(lane < c_out, centered, 0.0)
    var = jnp.sum(centered * centered, axis=-1, keepdims=True) * inv_c
    y = centered * jax.lax.rsqrt(var + 1e-5)
    y = y * params[1:2, :] + params[2:3, :]
    o_ref[...] = y.astype(o_ref.dtype)


def _resident_spec(block_shape):
    """Grid-invariant operand: single-buffer it when pl.Buffered is available
    (the second pipeline buffer is pure VMEM waste for constant index_maps)."""
    index_map = lambda i: (0, 0)
    buffered = getattr(pl, "Buffered", None)
    if buffered is not None:
        try:
            return pl.BlockSpec(block_shape, index_map, pipeline_mode=buffered(1))
        except Exception:  # older/newer BlockSpec signature -> double-buffered
            pass
    return pl.BlockSpec(block_shape, index_map)


@functools.partial(jax.jit, static_argnames=("patch_size", "stride", "out_dtype"))
def patch_embed(x, w, b, gamma, beta, *, patch_size, stride, out_dtype=None):
    """x: (B, C_in, H, W) NCHW.  Returns ((B, L, C_out), (H', W'))."""
    assert patch_size == stride, "non-overlapping patch embedding assumed"
    B, C_in, H, W = x.shape
    C_out = w.shape[0]
    ph = pw = patch_size
    Hp, Wp = H // ph, W // pw
    # conv "VALID" truncation (no-op slice when H/W divide evenly).
    x = x[:, :, : Hp * ph, : Wp * pw]
    N = B * Hp * Wp
    K = C_in * ph * pw
    if out_dtype is None:
        out_dtype = x.dtype  # pass jnp.bfloat16 to halve output HBM traffic

    # --- tiling ---------------------------------------------------------------
    C_pad = _round_up(C_out, 128)                # lane-dense (unmasked) stores
    # Fat row tiles (cap 512, multiple of 16 for bf16 sublane packing) while
    # targeting >=8 grid steps when N allows (>=2 per v7x TensorCore).
    tile_n = max(16, min(512, _round_up(pl.cdiv(N, 8), 16)))
    N_pad = _round_up(N, tile_n)
    grid = (N_pad // tile_n,)

    # --- GEMM operands ----------------------------------------------------------
    # Patch extraction (im2col), column order (c, ph, pw) matching the flattened
    # conv weight.  Cast to bf16 *before* the rearrangement so the extra HBM
    # pass it costs is at half width.
    # TODO(synk): keep activations NHWC upstream (or extract patches in-kernel)
    # to remove this extra HBM pass entirely.
    xq = x.astype(jnp.bfloat16)
    xp = xq.reshape(B, C_in, Hp, ph, Wp, pw)
    xp = jnp.transpose(xp, (0, 2, 4, 1, 3, 5)).reshape(N, K)
    xp = jnp.pad(xp, ((0, N_pad - N), (0, 0)))

    w_flat = w.reshape(C_out, K).T                                    # (K, C_out)
    w_flat = jnp.pad(w_flat, ((0, 0), (0, C_pad - C_out))).astype(jnp.bfloat16)

    # bias / gamma / beta packed into one (8, C_pad) f32 operand (rows 0..2).
    params = jnp.zeros((8, C_pad), jnp.float32)
    params = params.at[0, :C_out].set(b.astype(jnp.float32))
    params = params.at[1, :C_out].set(gamma.astype(jnp.float32))
    params = params.at[2, :C_out].set(beta.astype(jnp.float32))

    out_itemsize = jnp.dtype(out_dtype).itemsize
    cost = pl.CostEstimate(
        flops=2 * N_pad * K * C_pad,
        transcendentals=N_pad,
        bytes_accessed=(N_pad * K * 2 + K * C_pad * 2 + 8 * C_pad * 4
                        + N_pad * C_pad * out_itemsize),
    )

    # Explicit VMEM budget derived from the actual buffers (x2 margin for
    # Mosaic-internal scratch), clamped to v7x's 64 MiB physical VMEM.
    vmem_need = (2 * tile_n * K * 2                     # double-buffered bf16 LHS
                 + K * C_pad * 2                        # resident bf16 weight
                 + 8 * C_pad * 4                        # packed LN/bias params
                 + 2 * tile_n * C_pad * out_itemsize    # double-buffered output
                 + 4 * tile_n * C_pad * 4)              # in-kernel f32 temps
    vmem_limit = int(min(64 * 1024 * 1024, max(2 * vmem_need, 16 * 1024 * 1024)))

    kernel = functools.partial(_patch_embed_kernel, c_out=C_out)
    out = pl.pallas_call(
        kernel,
        out_shape=jax.ShapeDtypeStruct((N_pad, C_pad), out_dtype),
        grid_spec=pltpu.PrefetchScalarGridSpec(
            num_scalar_prefetch=0,
            grid=grid,
            in_specs=[
                pl.BlockSpec((tile_n, K), lambda i: (i, 0)),
                _resident_spec((K, C_pad)),        # resident weight (1 buffer)
                _resident_spec((8, C_pad)),        # packed bias/gamma/beta
            ],
            out_specs=pl.BlockSpec((tile_n, C_pad), lambda i: (i, 0)),
        ),
        compiler_params=pltpu.CompilerParams(
            dimension_semantics=("parallel",),
            vmem_limit_bytes=vmem_limit,
            allow_input_fusion=[True, True, True]),
        cost_estimate=cost,
    )(xp, w_flat, params)

    # TODO(synk): when C_out % 128 == 0 and N % tile_n == 0 this is a free
    # reshape; otherwise consumers that tolerate the padded layout should take
    # the padded buffer directly to avoid one extra HBM round trip.
    out = out[:N, :C_out].reshape(B, Hp * Wp, C_out)
    return out, (Hp, Wp)


def _reference(x, w, b, gamma, beta, *, stride):
    """Pure-JAX f32 reference: conv2d (NCHW) + flatten + transpose + LayerNorm."""
    y = jax.lax.conv_general_dilated(
        x.astype(jnp.float32), w.astype(jnp.float32),
        window_strides=(stride, stride), padding="VALID",
        dimension_numbers=("NCHW", "OIHW", "NCHW"))
    y = y + b.reshape(1, -1, 1, 1)
    B, C, Hp, Wp = y.shape
    y = y.reshape(B, C, Hp * Wp).transpose(0, 2, 1)  # (B, L, C)
    mean = jnp.mean(y, axis=-1, keepdims=True)
    var = jnp.mean((y - mean) ** 2, axis=-1, keepdims=True)
    y = (y - mean) / jnp.sqrt(var + 1e-5)
    y = y * gamma + beta
    return y, (Hp, Wp)


if __name__ == "__main__":
    key = jax.random.PRNGKey(0)
    B, C_in, H, W = 2, 4, 16, 16
    C_out = 32
    patch_size = stride = 4

    k_x, k_w = jax.random.split(key)
    x = jax.random.normal(k_x, (B, C_in, H, W), dtype=jnp.float32)

    # PyTorch-style init: conv weight ~ N(0, sqrt(2/fan_out)), bias = 0,
    # LayerNorm weight = 1, bias = 0.
    fan_out = patch_size * patch_size * C_out
    w = jax.random.normal(k_w, (C_out, C_in, patch_size, patch_size),
                          dtype=jnp.float32) * math.sqrt(2.0 / fan_out)
    b = jnp.zeros((C_out,), dtype=jnp.float32)
    gamma = jnp.ones((C_out,), dtype=jnp.float32)
    beta = jnp.zeros((C_out,), dtype=jnp.float32)

    out, size = patch_embed(x, w, b, gamma, beta,
                            patch_size=patch_size, stride=stride)
    out = jax.block_until_ready(out)

    ref, ref_size = _reference(x, w, b, gamma, beta, stride=stride)
    assert size == ref_size, (size, ref_size)
    assert out.shape == (B, (H // patch_size) * (W // patch_size), C_out)
    # bf16 MXU operands (f32 accumulation) -> looser tolerance vs f32 reference.
    max_err = float(jnp.max(jnp.abs(out - ref)))
    assert jnp.allclose(out, ref, atol=5e-2, rtol=5e-2), max_err

    print("KERNEL_OK")
</pallas_src>

<mosaic_0001>
module attributes {stable_mosaic.version = 11 : i64} {
  func.func @_patch_embed_kernel(%arg0: i32, %arg1: memref<16x64xbf16, #tpu.memory_space<vmem>>, %arg2: memref<64x128xbf16, #tpu.memory_space<vmem>>, %arg3: memref<8x128xf32, #tpu.memory_space<vmem>>, %arg4: memref<16x128xf32, #tpu.memory_space<vmem>>) attributes {dimension_semantics = [#tpu.dimension_semantics<parallel>], iteration_bounds = array<i64: 2>, scalar_prefetch = 0 : i64, scratch_operands = 0 : i64, tpu.core_type = #tpu.core_type<tc>, window_params = [{transform_indices = @transform_0, window_bounds = array<i64: 16, 64>}, {pipeline_mode = #tpu.pipeline_mode<synchronous>, transform_indices = @transform_1, window_bounds = array<i64: 64, 128>}, {pipeline_mode = #tpu.pipeline_mode<synchronous>, transform_indices = @transform_2, window_bounds = array<i64: 8, 128>}, {transform_indices = @transform_3, window_bounds = array<i64: 16, 128>}]} {
    %c0 = arith.constant 0 : index
    %c0_0 = arith.constant 0 : index
    %0 = vector.load %arg1[%c0, %c0_0] : memref<16x64xbf16, #tpu.memory_space<vmem>>, vector<16x64xbf16>
    %c0_1 = arith.constant 0 : index
    %c0_2 = arith.constant 0 : index
    %1 = vector.load %arg2[%c0_1, %c0_2] : memref<64x128xbf16, #tpu.memory_space<vmem>>, vector<64x128xbf16>
    %cst = arith.constant dense<0.000000e+00> : vector<16x128xf32>
    %2 = tpu.matmul %0, %1, %cst {dimension_numbers = #tpu.dot_dimension_numbers<[1], [0], [0], [1], [0, 0, 1, 1], [], []>} : vector<16x64xbf16>, vector<64x128xbf16>, vector<16x128xf32> -> vector<16x128xf32>
    %c0_3 = arith.constant 0 : index
    %c0_4 = arith.constant 0 : index
    %3 = vector.load %arg3[%c0_3, %c0_4] : memref<8x128xf32, #tpu.memory_space<vmem>>, vector<8x128xf32>
    %4 = vector.extract_strided_slice %3 {offsets = [0, 0], sizes = [1, 128], strides = [1, 1]} : vector<8x128xf32> to vector<1x128xf32>
    %5 = vector.broadcast %4 : vector<1x128xf32> to vector<16x128xf32>
    %6 = arith.addf %2, %5 : vector<16x128xf32>
    %cst_5 = arith.constant dense<0.000000e+00> : vector<16xf32>
    %7 = vector.multi_reduction <add>, %6, %cst_5 [1] : vector<16x128xf32> to vector<16xf32>
    %8 = vector.shape_cast %7 : vector<16xf32> to vector<16x1xf32>
    %cst_6 = arith.constant 3.125000e-02 : f32
    %9 = vector.broadcast %cst_6 : f32 to vector<16x1xf32>
    %10 = arith.mulf %8, %9 : vector<16x1xf32>
    %11 = vector.broadcast %10 : vector<16x1xf32> to vector<16x128xf32>
    %12 = arith.subf %6, %11 : vector<16x128xf32>
    %13 = tpu.iota {dimensions = array<i32: 1>} : vector<1x128xi32>
    %c32_i32 = arith.constant 32 : i32
    %14 = vector.broadcast %c32_i32 : i32 to vector<1x128xi32>
    %15 = arith.cmpi slt, %13, %14 : vector<1x128xi32>
    %cst_7 = arith.constant 0.000000e+00 : f32
    %16 = vector.shape_cast %15 : vector<1x128xi1> to vector<1x128xi1>
    %17 = vector.broadcast %16 : vector<1x128xi1> to vector<16x128xi1>
    %18 = vector.broadcast %cst_7 : f32 to vector<16x128xf32>
    %19 = arith.select %17, %12, %18 : vector<16x128xi1>, vector<16x128xf32>
    %20 = arith.mulf %19, %19 : vector<16x128xf32>
    %cst_8 = arith.constant dense<0.000000e+00> : vector<16xf32>
    %21 = vector.multi_reduction <add>, %20, %cst_8 [1] : vector<16x128xf32> to vector<16xf32>
    %22 = vector.shape_cast %21 : vector<16xf32> to vector<16x1xf32>
    %cst_9 = arith.constant 3.125000e-02 : f32
    %23 = vector.broadcast %cst_9 : f32 to vector<16x1xf32>
    %24 = arith.mulf %22, %23 : vector<16x1xf32>
    %cst_10 = arith.constant 9.99999974E-6 : f32
    %25 = vector.broadcast %cst_10 : f32 to vector<16x1xf32>
    %26 = arith.addf %24, %25 : vector<16x1xf32>
    %27 = math.rsqrt %26 : vector<16x1xf32>
    %28 = vector.broadcast %27 : vector<16x1xf32> to vector<16x128xf32>
    %29 = arith.mulf %19, %28 : vector<16x128xf32>
    %30 = vector.extract_strided_slice %3 {offsets = [1, 0], sizes = [1, 128], strides = [1, 1]} : vector<8x128xf32> to vector<1x128xf32>
    %31 = vector.broadcast %30 : vector<1x128xf32> to vector<16x128xf32>
    %32 = arith.mulf %29, %31 : vector<16x128xf32>
    %33 = vector.extract_strided_slice %3 {offsets = [2, 0], sizes = [1, 128], strides = [1, 1]} : vector<8x128xf32> to vector<1x128xf32>
    %34 = vector.broadcast %33 : vector<1x128xf32> to vector<16x128xf32>
    %35 = arith.addf %32, %34 : vector<16x128xf32>
    %c0_11 = arith.constant 0 : index
    %c0_12 = arith.constant 0 : index
    %36 = vector.load %arg4[%c0_11, %c0_12] : memref<16x128xf32, #tpu.memory_space<vmem>>, vector<16x128xf32>
    tpu.vector_store %arg4[%c0_11, %c0_12], %35 {strides = array<i32>} : memref<16x128xf32, #tpu.memory_space<vmem>>, vector<16x128xf32>,
    return
  }
  func.func @transform_0(%arg0: i32) -> (i32, i32) {
    %c0_i32 = arith.constant 0 : i32
    %c0_i32_0 = arith.constant 0 : i32
    return %arg0, %c0_i32 : i32, i32
  }
  func.func @transform_1(%arg0: i32) -> (i32, i32) {
    %c0_i32 = arith.constant 0 : i32
    %c0_i32_0 = arith.constant 0 : i32
    %c0_i32_1 = arith.constant 0 : i32
    return %c0_i32, %c0_i32_0 : i32, i32
  }
  func.func @transform_2(%arg0: i32) -> (i32, i32) {
    %c0_i32 = arith.constant 0 : i32
    %c0_i32_0 = arith.constant 0 : i32
    %c0_i32_1 = arith.constant 0 : i32
    return %c0_i32, %c0_i32_0 : i32, i32
  }
  func.func @transform_3(%arg0: i32) -> (i32, i32) {
    %c0_i32 = arith.constant 0 : i32
    %c0_i32_0 = arith.constant 0 : i32
    return %arg0, %c0_i32 : i32, i32
  }
}

</mosaic_0001>

<llo_original>
// kernel: patch_embed.2
$region0: #{patch_embed.2}
  #allocation0 [shape = 'u32[]', space=smem, size = 0x4, offset = 0x4, fixed_abs, tag = 'smem constant byte address 0x4 - core index']
  #allocation1 [shape = 'u32[144,128]{1,0:T(1,128)}', space=vmem, size = 0x12000, scoped, tag = 'internal scratch']
  #allocation2 [shape = 'u32[2048]{0}', space=vmem, size = 0x2000, scoped, tag = 'scoped memory for patch_embed.2']
  #allocation3 [shape = 'u32[2048]{0}', space=vmem, size = 0x2000, scoped, tag = 'scoped memory for patch_embed.2']
  #allocation4 [shape = 'u32[2048]{0}', space=vmem, size = 0x2000, scoped, tag = 'scoped memory for patch_embed.2']
  #allocation5 [shape = 'u32[2048]{0}', space=vmem, size = 0x2000, scoped, tag = 'scoped memory for patch_embed.2']
  #allocation6 [shape = 'u32[2048]{0}', space=vmem, size = 0x2000, scoped, tag = 'scoped memory for patch_embed.2']
  %s0 = inlined_call_operand.vmem [shape: bf16[32,64], index: 0, kind: input, shape index: {}]
  %s1 = inlined_call_operand.vmem [shape: f32[8,128], index: 1, kind: input, shape index: {}]
  %s2 = inlined_call_operand.vmem [shape: bf16[64,32], index: 2, kind: input, shape index: {}]
  %s3 = inlined_call_operand.<no memory space> [shape: bf16[], index: 3, kind: input, shape index: {}]
  %s4 = inlined_call_operand.hbm [shape: f32[32,128], index: 4, kind: output, shape index: {}]
  %s5 = sld [smem:[#allocation0]]
  $region45: #{patch_embed.2} parent=0
    _
  %s7 = ssub.s32 1, %s5
  %s8 = scalar_select 0, %s7, %s5
  %v9 = vstv %s3
  %v10 = vunpack.i.l.bf16 %v9
  %v12 = vunpack.i.h.bf16 %v9
  $region1: #{patch_embed.2} parent=0
    #allocation7 [shape = 'u8[16384]{0}', space=vmem, size = 0x4000, scoped, tag = 'output window, operand 0']
    #allocation8 [shape = 's32[2]{0}', space=sflag, size = 0x8, scoped, tag = 'scoped memory for patch_embed.2']
    %14 = vsyncpa [#allocation8], 0
    %s15 = scalar_lea.sflag [#allocation8], 1
    %16 = vsyncpa %s15, 0
    loop: start=0, step=1, limit=4
    $region2: #{patch_embed.2} parent=1 // loop_pre_header
      _
    $region3: #{patch_embed.2} parent=1 // loop_header
      %s18 = sphi 0, %s22
      %p19 = scmp.ge.s32.totalorder %s18, 4
      %s28 = sphi 0, %s30
      %s31 = sphi 0, %s28
      %s32 = sphi 0, %s31
      %s48 = sphi 0, %s32
      %s52 = sphi 0, %s52
      %s54 = sphi 0, %s52
      %s55 = sphi 0, %s54
      %s69 = sphi 0, %s55
      %s73 = sphi 0, %s73
      %s75 = sphi 0, %s73
      %s76 = sphi 0, %s75
      %s90 = sphi 0, %s76
      %s96 = sphi 0, %s98
      %s99 = sphi 0, %s96
      %s100 = sphi 0, %s99
      %s116 = sphi 0, %s100
    $region4: #{patch_embed.2} parent=1 // loop_header_branch
      %21 = sbr.rel (%p19) target = $region8
    $region5: #{patch_embed.2} parent=1 // loop_body
      %s23 = ssub.s32 %s18, 1
      %s24 = ssub.s32 %s18, 2
      %s25 = sadd.s32 %s18, 1
      %s26 = ssub.s32 %s18, %s25
      %p27 = scmp.eq.s32.totalorder %s26, 0
      %s29 = sadd.s32 %s28, 1
      %s30 = scalar_select %p27, %s28, %s29
      %p33 = pneg %p27
      %p34 = scmp.eq.s32.totalorder %s18, 1
      %p35 = por %p33, %p34
      %p36 = scmp.ne.s32.totalorder %s28, %s31
      %p37 = scmp.eq.s32.totalorder %s18, 0
      %p38 = por %p36, %p37
      %p39 = scmp.ne.s32.totalorder %s28, %s31
      %p40 = scmp.eq.s32.totalorder %s23, 1
      %p41 = por %p39, %p40
      %p42 = scmp.ne.s32.totalorder %s31, %s32
      %p43 = scmp.eq.s32.totalorder %s23, 0
      %p44 = por %p42, %p43
      %p45 = scmp.ne.s32.totalorder %s31, %s32
      %p46 = scmp.eq.s32.totalorder %s24, 1
      %p47 = por %p45, %p46
      %p49 = scmp.ne.s32.totalorder %s32, %s48
      %p50 = scmp.eq.s32.totalorder %s24, 0
      %p51 = por %p49, %p50
      %s53 = sadd.s32 %s52, 1
      %p56 = scmp.eq.s32.totalorder %s18, 1
      %p57 = scmp.ne.s32.totalorder %s52, %s54
      %p58 = scmp.eq.s32.totalorder %s18, 0
      %p59 = por %p57, %p58
      %p60 = scmp.ne.s32.totalorder %s52, %s54
      %p61 = scmp.eq.s32.totalorder %s23, 1
      %p62 = por %p60, %p61
      %p63 = scmp.ne.s32.totalorder %s54, %s55
      %p64 = scmp.eq.s32.totalorder %s23, 0
      %p65 = por %p63, %p64
      %p66 = scmp.ne.s32.totalorder %s54, %s55
      %p67 = scmp.eq.s32.totalorder %s24, 1
      %p68 = por %p66, %p67
      %p70 = scmp.ne.s32.totalorder %s55, %s69
      %p71 = scmp.eq.s32.totalorder %s24, 0
      %p72 = por %p70, %p71
      %s74 = sadd.s32 %s73, 1
      %p77 = scmp.eq.s32.totalorder %s18, 1
      %p78 = scmp.ne.s32.totalorder %s73, %s75
      %p79 = scmp.eq.s32.totalorder %s18, 0
      %p80 = por %p78, %p79
      %p81 = scmp.ne.s32.totalorder %s73, %s75
      %p82 = scmp.eq.s32.totalorder %s23, 1
      %p83 = por %p81, %p82
      %p84 = scmp.ne.s32.totalorder %s75, %s76
      %p85 = scmp.eq.s32.totalorder %s23, 0
      %p86 = por %p84, %p85
      %p87 = scmp.ne.s32.totalorder %s75, %s76
      %p88 = scmp.eq.s32.totalorder %s24, 1
      %p89 = por %p87, %p88
      %p91 = scmp.ne.s32.totalorder %s76, %s90
      %p92 = scmp.eq.s32.totalorder %s24, 0
      %p93 = por %p91, %p92
      %s94 = ssub.s32 %s18, %s25
      %p95 = scmp.eq.s32.totalorder %s94, 0
      %s97 = sadd.s32 %s96, 1
      %s98 = scalar_select %p95, %s96, %s97
      %p101 = pneg %p95
      %p102 = scmp.eq.s32.totalorder %s18, 1
      %p103 = por %p101, %p102
      %p104 = scmp.ne.s32.totalorder %s96, %s99
      %p105 = scmp.eq.s32.totalorder %s18, 0
      %p106 = por %p104, %p105
      %p107 = scmp.ne.s32.totalorder %s96, %s99
      %p108 = scmp.eq.s32.totalorder %s23, 1
      %p109 = por %p107, %p108
      %p110 = scmp.ne.s32.totalorder %s99, %s100
      %p111 = scmp.eq.s32.totalorder %s23, 0
      %p112 = por %p110, %p111
      %p113 = scmp.ne.s32.totalorder %s99, %s100
      %p114 = scmp.eq.s32.totalorder %s24, 1
      %p115 = por %p113, %p114
      %p117 = scmp.ne.s32.totalorder %s100, %s116
      %p118 = scmp.eq.s32.totalorder %s24, 0
      %p119 = por %p117, %p118
      %p120 = scmp.le.s32.totalorder 1, %s18
      %p121 = scmp.lt.s32.totalorder %s18, 3
      %p122 = pnand %p120, %p121
      %p123 = pneg %p122
      // Predicated region
      $region9: #{patch_embed.2} parent=5 // pred_check
        _
      $region10: #{patch_embed.2} parent=5 // pred_check_branch
        %125 = sbr.rel (%p122) target = $region12
      $region11: #{patch_embed.2} parent=5 // pred_region
        %s126 = ssub.s32 %s18, 1
        // Predicated region
        $region13: #{patch_embed.2} parent=11 // pred_check
          %p127 = pneg %p65
        $region14: #{patch_embed.2} parent=11 // pred_check_branch
          %129 = sbr.rel (%p127) target = $region16
        $region15: #{patch_embed.2} parent=11 // pred_region
          _
        $region16: #{patch_embed.2} parent=11 // pred_fallthru
          _
        // Predicated region
        $region17: #{patch_embed.2} parent=11 // pred_check
          %p130 = pneg %p86
        $region18: #{patch_embed.2} parent=11 // pred_check_branch
          %132 = sbr.rel (%p130) target = $region20
        $region19: #{patch_embed.2} parent=11 // pred_region
          _
        $region20: #{patch_embed.2} parent=11 // pred_fallthru
          _
      $region12: #{patch_embed.2} parent=5 // pred_fallthru
        _
      %p133 = scmp.lt.s32.totalorder %s18, 2
      // Predicated region
      $region21: #{patch_embed.2} parent=5 // pred_check
        %p134 = pneg %p133
      $region22: #{patch_embed.2} parent=5 // pred_check_branch
        %136 = sbr.rel (%p134) target = $region24
      $region23: #{patch_embed.2} parent=5 // pred_region
        // Predicated region
        $region25: #{patch_embed.2} parent=23 // pred_check
          %p137 = pneg %p38
        $region26: #{patch_embed.2} parent=23 // pred_check_branch
          %139 = sbr.rel (%p137) target = $region28
        $region27: #{patch_embed.2} parent=23 // pred_region
          %s140 = smul.u32 2, %s18
          %p141 = scmp.lt.s32.totalorder %s140, 3
          %s142 = scalar_select %p141, %s140, 3
          %s143 = smul.addr %s142, 4
          %s144 = scalar_lea.vmem %s0, %s143
          %s145 = smul.u32 2, %s18
        $region28: #{patch_embed.2} parent=23 // pred_fallthru
          _
      $region24: #{patch_embed.2} parent=5 // pred_fallthru
        _
      %p146 = scmp.le.s32.totalorder 1, %s18
      %p147 = scmp.lt.s32.totalorder %s18, 3
      %p148 = pnand %p146, %p147
      %p149 = pneg %p148
      // Predicated region
      $region29: #{patch_embed.2} parent=5 // pred_check
        _
      $region30: #{patch_embed.2} parent=5 // pred_check_branch
        %151 = sbr.rel (%p148) target = $region32
      $region31: #{patch_embed.2} parent=5 // pred_region
        #allocation9 [shape = 'u8[16384]{0}', space=vmem, size = 0x4000, dematerialized = true, scoped, tag = 'FusionAdapter Buffer %fusion.1 = bf16[64,128]{1,0:T(8,128)(2,1)} fusion(%param_2.1, %param_3), kind=kLoop, calls=%fused_computation.2.clone, metadata={op_name="jit(patch_embed)/jit(_pad)/pad" stack_frame_id=13}']
        %s152 = ssub.s32 %s18, 1
        %s153 = smul.u32 2, %s23
        %p154 = scmp.lt.s32.totalorder %s153, 3
        %s155 = scalar_select %p154, %s153, 3
        %s156 = smul.addr %s155, 4
        %s157 = scalar_lea.vmem %s0, %s156
        %p158 = pneg %p44
        %p159 = pneg %p41
        %p160 = pneg %p65
        %p161 = pneg %p62
        %p162 = pneg %p86
        %p163 = pneg %p83
        %p164 = pneg %p112
        %p165 = pneg %p109
        %s166 = sand.u32 %s99, 1
        %s167 = scalar_lea.sflag [#allocation8], %s166
        %s168 = sand.u32 %s99, 1
        %s169 = smul.addr %s168, 16
        %s170 = scalar_lea.vmem [#allocation7], %s169
        %s171 = smul.u32 2, %s23
        %p172 = scmp.lt.s32.totalorder %s171, 3
        %s173 = scalar_select %p172, %s171, 3
        %s174 = smul.addr %s173, 4
        %s175 = scalar_lea.vmem %s0, %s174
        %s176 = smul.u32 2, %s23
        %s177 = smul.u32 2, %s23
        %s179 = sor.u32 255, 127
        %s180 = sand.u32 %s179, 85
        %s181 = sshrl.u32 %s180, 1
        %s182 = sor.u32 %s180, %s181
        %s183 = sand.u32 51, %s182
        %s184 = sshrl.u32 %s183, 2
        %s185 = sor.u32 %s183, %s184
        %s186 = sand.u32 15, %s185
        %v187 = vld [vmem:[%s2] sm:%s186]
        %v188 = vunpack.c.l.bf16 %v187
        %v189 = vunpack.c.h.bf16 %v187
        %v190 = vlaneseq
        %v191 = vand.u32 %v190, 127
        %vm193 = vcmp.lt.s32.totalorder %v191, 32
        %v194 = vsel %vm193, %v188, %v10
        %v195 = vpack.c.bf16 0.0, %v194
        %s197 = ssub.s32 16, 1
        %198 = vst [vmem:[#allocation9] sm:%s197] %v195
        %s199 = scalar_lea.vmem %s2, 4
        %s201 = sor.u32 255, 127
        %s202 = sand.u32 %s201, 85
        %s203 = sshrl.u32 %s202, 1
        %s204 = sor.u32 %s202, %s203
        %s205 = sand.u32 51, %s204
        %s206 = sshrl.u32 %s205, 2
        %s207 = sor.u32 %s205, %s206
        %s208 = sand.u32 15, %s207
        %v209 = vld [vmem:[%s199] sm:%s208]
        %v210 = vunpack.c.l.bf16 %v209
        %v211 = vunpack.c.h.bf16 %v209
        %v212 = vlaneseq
        %v213 = vand.u32 %v212, 127
        %vm215 = vcmp.lt.s32.totalorder %v213, 32
        %v216 = vsel %vm215, %v210, %v10
        %s217 = scalar_lea.vmem [#allocation9], 4
        %v218 = vpack.c.bf16 0.0, %v216
        %s220 = ssub.s32 16, 1
        %221 = vst [vmem:[%s217] sm:%s220] %v218
        %s222 = scalar_lea.vmem %s2, 8
        %s224 = sor.u32 255, 127
        %s225 = sand.u32 %s224, 85
        %s226 = sshrl.u32 %s225, 1
        %s227 = sor.u32 %s225, %s226
        %s228 = sand.u32 51, %s227
        %s229 = sshrl.u32 %s228, 2
        %s230 = sor.u32 %s228, %s229
        %s231 = sand.u32 15, %s230
        %v232 = vld [vmem:[%s222] sm:%s231]
        %v233 = vunpack.c.l.bf16 %v232
        %v234 = vunpack.c.h.bf16 %v232
        %v235 = vlaneseq
        %v236 = vand.u32 %v235, 127
        %vm238 = vcmp.lt.s32.totalorder %v236, 32
        %v239 = vsel %vm238, %v233, %v10
        %s240 = scalar_lea.vmem [#allocation9], 8
        %v241 = vpack.c.bf16 0.0, %v239
        %s243 = ssub.s32 16, 1
        %244 = vst [vmem:[%s240] sm:%s243] %v241
        %s245 = scalar_lea.vmem %s2, 12
        %s247 = sor.u32 255, 127
        %s248 = sand.u32 %s247, 85
        %s249 = sshrl.u32 %s248, 1
        %s250 = sor.u32 %s248, %s249
        %s251 = sand.u32 51, %s250
        %s252 = sshrl.u32 %s251, 2
        %s253 = sor.u32 %s251, %s252
        %s254 = sand.u32 15, %s253
        %v255 = vld [vmem:[%s245] sm:%s254]
        %v256 = vunpack.c.l.bf16 %v255
        %v257 = vunpack.c.h.bf16 %v255
        %v258 = vlaneseq
        %v259 = vand.u32 %v258, 127
        %vm261 = vcmp.lt.s32.totalorder %v259, 32
        %v262 = vsel %vm261, %v256, %v10
        %s263 = scalar_lea.vmem [#allocation9], 12
        %v264 = vpack.c.bf16 0.0, %v262
        %s266 = ssub.s32 16, 1
        %267 = vst [vmem:[%s263] sm:%s266] %v264
        %s268 = scalar_lea.vmem %s2, 16
        %s270 = sor.u32 255, 127
        %s271 = sand.u32 %s270, 85
        %s272 = sshrl.u32 %s271, 1
        %s273 = sor.u32 %s271, %s272
        %s274 = sand.u32 51, %s273
        %s275 = sshrl.u32 %s274, 2
        %s276 = sor.u32 %s274, %s275
        %s277 = sand.u32 15, %s276
        %v278 = vld [vmem:[%s268] sm:%s277]
        %v279 = vunpack.c.l.bf16 %v278
        %v280 = vunpack.c.h.bf16 %v278
        %v281 = vlaneseq
        %v282 = vand.u32 %v281, 127
        %vm284 = vcmp.lt.s32.totalorder %v282, 32
        %v285 = vsel %vm284, %v279, %v10
        %s286 = scalar_lea.vmem [#allocation9], 16
        %v287 = vpack.c.bf16 0.0, %v285
        %s289 = ssub.s32 16, 1
        %290 = vst [vmem:[%s286] sm:%s289] %v287
        %s291 = scalar_lea.vmem %s2, 20
        %s293 = sor.u32 255, 127
        %s294 = sand.u32 %s293, 85
        %s295 = sshrl.u32 %s294, 1
        %s296 = sor.u32 %s294, %s295
        %s297 = sand.u32 51, %s296
        %s298 = sshrl.u32 %s297, 2
        %s299 = sor.u32 %s297, %s298
        %s300 = sand.u32 15, %s299
        %v301 = vld [vmem:[%s291] sm:%s300]
        %v302 = vunpack.c.l.bf16 %v301
        %v303 = vunpack.c.h.bf16 %v301
        %v304 = vlaneseq
        %v305 = vand.u32 %v304, 127
        %vm307 = vcmp.lt.s32.totalorder %v305, 32
        %v308 = vsel %vm307, %v302, %v10
        %s309 = scalar_lea.vmem [#allocation9], 20
        %v310 = vpack.c.bf16 0.0, %v308
        %s312 = ssub.s32 16, 1
        %313 = vst [vmem:[%s309] sm:%s312] %v310
        %s314 = scalar_lea.vmem %s2, 24
        %s316 = sor.u32 255, 127
        %s317 = sand.u32 %s316, 85
        %s318 = sshrl.u32 %s317, 1
        %s319 = sor.u32 %s317, %s318
        %s320 = sand.u32 51, %s319
        %s321 = sshrl.u32 %s320, 2
        %s322 = sor.u32 %s320, %s321
        %s323 = sand.u32 15, %s322
        %v324 = vld [vmem:[%s314] sm:%s323]
        %v325 = vunpack.c.l.bf16 %v324
        %v326 = vunpack.c.h.bf16 %v324
        %v327 = vlaneseq
        %v328 = vand.u32 %v327, 127
        %vm330 = vcmp.lt.s32.totalorder %v328, 32
        %v331 = vsel %vm330, %v325, %v10
        %s332 = scalar_lea.vmem [#allocation9], 24
        %v333 = vpack.c.bf16 0.0, %v331
        %s335 = ssub.s32 16, 1
        %336 = vst [vmem:[%s332] sm:%s335] %v333
        %s337 = scalar_lea.vmem %s2, 28
        %s339 = sor.u32 255, 127
        %s340 = sand.u32 %s339, 85
        %s341 = sshrl.u32 %s340, 1
        %s342 = sor.u32 %s340, %s341
        %s343 = sand.u32 51, %s342
        %s344 = sshrl.u32 %s343, 2
        %s345 = sor.u32 %s343, %s344
        %s346 = sand.u32 15, %s345
        %v347 = vld [vmem:[%s337] sm:%s346]
        %v348 = vunpack.c.l.bf16 %v347
        %v349 = vunpack.c.h.bf16 %v347
        %v350 = vlaneseq
        %v351 = vand.u32 %v350, 127
        %vm353 = vcmp.lt.s32.totalorder %v351, 32
        %v354 = vsel %vm353, %v348, %v10
        %s355 = scalar_lea.vmem [#allocation9], 28
        %v356 = vpack.c.bf16 0.0, %v354
        %s358 = ssub.s32 16, 1
        %359 = vst [vmem:[%s355] sm:%s358] %v356
        %v361 = vld [vmem:[%s175] sm:$0xf]
        %v362 = vld [vmem:[%s175 + $0x4] sm:$0xf]
        %v363 = vld [vmem:[#allocation9] sm:$0xf]
        %v364 = vld [vmem:[#allocation9 + $0x4] sm:$0xf]
        %v365 = vld [vmem:[#allocation9 + $0x8] sm:$0xf]
        %v366 = vld [vmem:[#allocation9 + $0xc] sm:$0xf]
        %v367 = vld [vmem:[#allocation9 + $0x10] sm:$0xf]
        %v368 = vld [vmem:[#allocation9 + $0x14] sm:$0xf]
        %v369 = vld [vmem:[#allocation9 + $0x18] sm:$0xf]
        %v370 = vld [vmem:[#allocation9 + $0x1c] sm:$0xf]
        %v371 = vld [vmem:[%s1] sm:$0xff]
        %v372 = vlaneseq
        %v373 = vshrl.u32 %v372, 7
        %v374 = vsub.s32 0, %v373
        %v375 = vrot.slane %v371, %v374
        %v378 = vunpack.c.l.b16 %v361
        %v379 = vunpack.c.l.b16 %v362
        %v380 = vpack.c.b16 %v379, %v378
        %v389 = vunpack.c.l.b16 %v363
        %v390 = vunpack.c.l.b16 %v364
        %v391 = vunpack.c.l.b16 %v365
        %v392 = vunpack.c.l.b16 %v366
        %v393 = vunpack.c.l.b16 %v367
        %v394 = vunpack.c.l.b16 %v368
        %v395 = vunpack.c.l.b16 %v369
        %v396 = vunpack.c.l.b16 %v370
        %v397 = vpack.c.b16 %v390, %v389
        %v398 = vpack.c.b16 %v392, %v391
        %v399 = vpack.c.b16 %v394, %v393
        %v400 = vpack.c.b16 %v396, %v395
        %vm405 = vcmask 523264
        %v407 = vsel %vm405, %v380, 0
        %409 = vmatprep.subr.bf16.mxu0 0
        %410 = vmatpush1.bf16.msra.mxu0 0
        %411 = vmatprep.subr.bf16.mxu0 0
        %412 = vmatpush1.bf16.msra.mxu0 0
        %413 = vmatprep.subr.bf16.mxu0 0
        %414 = vmatpush1.bf16.msra.mxu0 0
        %415 = vmatprep.subr.bf16.mxu0 0
        %416 = vmatpush1.bf16.msra.mxu0 0
        %417 = vmatprep.subr.bf16.mxu0 0
        %418 = vmatpush1.bf16.msra.mxu0 %v400
        %419 = vmatprep.subr.bf16.mxu0 0
        %420 = vmatpush1.bf16.msra.mxu0 %v399
        %421 = vmatprep.subr.bf16.mxu0 0
        %422 = vmatpush1.bf16.msra.mxu0 %v398
        %423 = vmatprep.subr.bf16.mxu0 0
        %424 = vmatpush1.bf16.msra.mxu0 %v397
        %425 = vmatprep.subr.bf16.mxu0 0
        %426 = vmatpush2.bf16.msra.mxu0 0
        %427 = vmatprep.subr.bf16.mxu0 0
        %428 = vmatpush2.bf16.msra.mxu0 0
        %429 = vmatprep.subr.bf16.mxu0 0
        %430 = vmatpush2.bf16.msra.mxu0 0
        %431 = vmatprep.subr.bf16.mxu0 0
        %432 = vmatpush2.bf16.msra.mxu0 0
        %433 = vmatprep.subr.bf16.mxu0 0
        %434 = vmatpush2.bf16.msra.mxu0 0
        %435 = vmatprep.subr.bf16.mxu0 0
        %436 = vmatpush2.bf16.msra.mxu0 0
        %437 = vmatprep.subr.bf16.mxu0 0
        %438 = vmatpush2.bf16.msra.mxu0 0
        %439 = vmatprep.subr.bf16.mxu0 0
        %440 = vmatpush2.bf16.msra.mxu0 0
        %441 = vmatprep.mubr.bf16.mxu0 0
        %442 = vmatmul.mubr.bf16.gmra.mxu0 %v407
        %v443 = vpop.f32.mrf.mxu0
        %v444 = vadd.f32 %v375, %v443
        %v445 = vpop.f32.mrf.mxu0
        %v446 = vpop.f32.mrf.mxu0
        %v447 = vadd.f32 %v375, %v446
        %v448 = vpop.f32.mrf.mxu0
        %449 = vdwg.mxu0
        %450 = vadd.xlane.f32.xlu0 %v444
        %v451 = vpop.xlane.xlu0 %450
        %452 = vadd.xlane.f32.xlu0 %v447
        %v453 = vpop.xlane.xlu0 %452
        %v454 = vmul.f32 %v451, 0.03125
        %v455 = vmul.f32 %v453, 0.03125
        %v456 = vsub.f32 %v444, %v454
        %v457 = vsub.f32 %v447, %v455
        %v458 = vlaneseq
        %v459 = vand.u32 %v458, 127
        %vm460 = vcmp.lt.s32.totalorder %v459, 32
        %v461 = vsel %vm460, 1, 0
        %vm462 = vcmp.eq.s32.totalorder %v461, 1
        %v463 = vsel %vm462, %v456, 0.0
        %v464 = vsel %vm462, %v457, 0.0
        %v465 = vmul.f32 %v463, %v463
        %v466 = vmul.f32 %v464, %v464
        %467 = vadd.xlane.f32.xlu0 %v465
        %v468 = vpop.xlane.xlu0 %467
        %469 = vadd.xlane.f32.xlu0 %v466
        %v470 = vpop.xlane.xlu0 %469
        %v471 = vmul.f32 %v468, 0.03125
        %v472 = vmul.f32 %v470, 0.03125
        %v473 = vadd.f32 %v471, 1e-05
        %v474 = vadd.f32 %v472, 1e-05
        %v475 = vrsqrt.pop %v473
        %v476 = vrsqrt.pop %v474
        %v477 = vmul.f32 %v463, %v475
        %v478 = vmul.f32 %v464, %v476
        %v479 = vlaneseq
        %v480 = vshrl.u32 %v479, 7
        %v481 = vsub.s32 1, %v480
        %v482 = vrot.slane %v371, %v481
        %v483 = vmul.f32 %v477, %v482
        %v484 = vmul.f32 %v478, %v482
        %v485 = vlaneseq
        %v486 = vshrl.u32 %v485, 7
        %v487 = vsub.s32 2, %v486
        %v488 = vrot.slane %v371, %v487
        %v489 = vadd.f32 %v483, %v488
        %v490 = vadd.f32 %v484, %v488
        %491 = vst [vmem:[%s170] sm:$0xff] %v489
        %492 = vst [vmem:[%s170 + $0x8] sm:$0xff] %v490
        %s493 = sand.u32 %s99, 1
        %s494 = scalar_lea.sflag [#allocation8], %s493
        %s495 = sand.u32 %s99, 1
        %s496 = smul.addr %s495, 16
        %s497 = scalar_lea.vmem [#allocation7], %s496
        // Predicated region
        $region33: #{patch_embed.2} parent=31 // pred_check
          %p498 = pneg %p109
        $region34: #{patch_embed.2} parent=31 // pred_check_branch
          %500 = sbr.rel (%p498) target = $region36
        $region35: #{patch_embed.2} parent=31 // pred_region
          %s501 = smul.u32 2, %s23
          %s503 = ssub.s32 256, 256
          %504 = vsyncadd %s494, %s503
          %s505 = smul.addr %s501, 128
          %s506 = scalar_lea.hbm %s4, %s505
          %s507 = sshll.u32 %s497, 4
          %s508 = int_to_ptr.vmem [resolvable:$true] %s507
          %513 = dma.vmem_to_hbm [thread:$0]  %s508, 256, %s506, %s494, 128, 128, 8
        $region36: #{patch_embed.2} parent=31 // pred_fallthru
          _
      $region32: #{patch_embed.2} parent=5 // pred_fallthru
        _
      %p514 = scmp.le.s32.totalorder 2, %s18
      // Predicated region
      $region37: #{patch_embed.2} parent=5 // pred_check
        %p515 = pneg %p514
      $region38: #{patch_embed.2} parent=5 // pred_check_branch
        %517 = sbr.rel (%p515) target = $region40
      $region39: #{patch_embed.2} parent=5 // pred_region
        %s518 = ssub.s32 %s18, 2
        // Predicated region
        $region41: #{patch_embed.2} parent=39 // pred_check
          %p519 = pneg %p115
        $region42: #{patch_embed.2} parent=39 // pred_check_branch
          %521 = sbr.rel (%p519) target = $region44
        $region43: #{patch_embed.2} parent=39 // pred_region
          %s522 = sand.u32 %s100, 1
          %s523 = scalar_lea.sflag [#allocation8], %s522
          %s524 = sand.u32 %s100, 1
          %s525 = smul.addr %s524, 16
          %s526 = scalar_lea.vmem [#allocation7], %s525
          %527 = dma.done %s523, 256
        $region44: #{patch_embed.2} parent=39 // pred_fallthru
          _
      $region40: #{patch_embed.2} parent=5 // pred_fallthru
        _
    $region6: #{patch_embed.2} parent=1 // loop_footer
      %s22 = sadd.s32 1, %s18
    $region7: #{patch_embed.2} parent=1 // loop_footer_branch
      %17 = sbr.rel target = $region3
    $region8: #{patch_embed.2} parent=1 // loop_exit
      _
    %528 = vsyncpa [#allocation8], 1
    %s529 = scalar_lea.sflag [#allocation8], 1
    %530 = vsyncpa %s529, 1

</llo_original>
